<compile_context>
chip_gen: v5e
topology: v5e:2x2
jax: 0.10.0
libtpu: 0.0.40
codegen_flags: <defaults>
</compile_context>

<pallas_src>
import functools

import jax
import jax.numpy as jnp
from jax.experimental import pallas as pl
from jax.experimental.pallas import tpu as pltpu

_BN_EPS = 1e-5
_MAX_FULL_K = 1024          # beyond this, tile the reduction dimension
_TK = 512                   # K tile when the reduction axis is tiled
_LANE = 128
_VMEM_LIMIT = 32 * 1024 * 1024   # safe on v5e/v6e (128 MiB) and v7x (64 MiB)


# --------------------------------------------------------------------------
# Tiling / padding helpers
# --------------------------------------------------------------------------
def _ceil_to(x, m):
    return -(-x // m) * m


def _pad2d(a, rows, cols):
    r, c = a.shape
    if r == rows and c == cols:
        return a
    return jnp.pad(a, ((0, rows - r), (0, cols - c)))


def _row_tiling(m):
    """Pick (m_pad, tm): large tiles for HBM-roofline efficiency, zero-padded."""
    if m >= 512:
        tm = 512
    elif m >= 128:
        tm = 128
    else:
        tm = _ceil_to(m, 8)          # tiny problems: one sublane-aligned tile
    return _ceil_to(m, tm), tm


def _col_tiling(n):
    """Pick (n_pad, tn): lane-dense (multiple-of-128) output tiles."""
    if n > 1024:
        tn = 512
    else:
        tn = _ceil_to(n, _LANE)
    return _ceil_to(n, tn), tn


def _compiler_params(semantics):
    return pltpu.CompilerParams(dimension_semantics=semantics,
                                vmem_limit_bytes=_VMEM_LIMIT)


# --------------------------------------------------------------------------
# Pallas kernels
# --------------------------------------------------------------------------
def _gemm_bias_act_kernel(x_ref, w_ref, b_ref, o_ref, acc_ref, *, relu, k_steps):
    """out = act(x @ w + bias), accumulated in an f32 VMEM scratch over K tiles."""
    @pl.when(pl.program_id(2) == 0)
    def _():
        acc_ref[...] = jnp.zeros_like(acc_ref)

    acc_ref[...] += jnp.dot(x_ref[...], w_ref[...],
                            preferred_element_type=jnp.float32)

    @pl.when(pl.program_id(2) == k_steps - 1)
    def _():
        y = acc_ref[...] + b_ref[...]
        if relu:
            y = jnp.maximum(y, 0.0)
        o_ref[...] = y.astype(o_ref.dtype)


def _dual_gemm_bias_relu_kernel(x_ref, w_ref, xs_ref, ws_ref, b_ref, o_ref):
    """out = relu(x @ w + xs @ ws + bias): conv3+bn3 fused with projection shortcut."""
    y = jnp.dot(x_ref[...], w_ref[...], preferred_element_type=jnp.float32)
    y = y + jnp.dot(xs_ref[...], ws_ref[...], preferred_element_type=jnp.float32)
    y = y + b_ref[...]
    o_ref[...] = jnp.maximum(y, 0.0).astype(o_ref.dtype)


def _gemm_bias_residual_relu_kernel(x_ref, w_ref, r_ref, b_ref, o_ref):
    """out = relu(x @ w + bias + residual): conv3+bn3 fused with identity shortcut."""
    y = jnp.dot(x_ref[...], w_ref[...], preferred_element_type=jnp.float32)
    y = y + r_ref[...].astype(jnp.float32) + b_ref[...]
    o_ref[...] = jnp.maximum(y, 0.0).astype(o_ref.dtype)


# --------------------------------------------------------------------------
# pallas_call wrappers (padding, bf16 casts, tiling, cost estimates)
# --------------------------------------------------------------------------
def gemm_bias_act(x, w, bias, *, relu, out_dtype=jnp.bfloat16):
    """act(x @ w + bias) with bf16 MXU operands, f32 accumulation, K tiling."""
    m, k = x.shape
    n = w.shape[1]
    m_pad, tm = _row_tiling(m)
    n_pad, tn = _col_tiling(n)
    if k > _MAX_FULL_K:
        tk = _TK
        k_pad = _ceil_to(k, tk)
    else:
        tk = k
        k_pad = k
    k_steps = k_pad // tk

    xb = _pad2d(x, m_pad, k_pad).astype(jnp.bfloat16)
    wb = _pad2d(w, k_pad, n_pad).astype(jnp.bfloat16)
    bb = _pad2d(bias.reshape(1, n).astype(jnp.float32), 1, n_pad)

    flops = 2 * m_pad * k_pad * n_pad
    bytes_accessed = (xb.size * 2 + wb.size * 2 + bb.size * 4
                      + m_pad * n_pad * jnp.dtype(out_dtype).itemsize)

    out = pl.pallas_call(
        functools.partial(_gemm_bias_act_kernel, relu=relu, k_steps=k_steps),
        out_shape=jax.ShapeDtypeStruct((m_pad, n_pad), out_dtype),
        grid=(m_pad // tm, n_pad // tn, k_steps),
        in_specs=[
            pl.BlockSpec((tm, tk), lambda i, j, kk: (i, kk)),
            pl.BlockSpec((tk, tn), lambda i, j, kk: (kk, j)),
            pl.BlockSpec((1, tn), lambda i, j, kk: (0, j)),
        ],
        out_specs=pl.BlockSpec((tm, tn), lambda i, j, kk: (i, j)),
        scratch_shapes=[pltpu.VMEM((tm, tn), jnp.float32)],
        compiler_params=_compiler_params(("parallel", "parallel", "arbitrary")),
        cost_estimate=pl.CostEstimate(flops=flops, transcendentals=0,
                                      bytes_accessed=bytes_accessed),
    )(xb, wb, bb)
    return out[:m, :n]


def gemm_projection_add_relu(x, w, xs, ws, bias, *, out_dtype=jnp.float32):
    """relu(x @ w + xs @ ws + bias) — fused conv3+bn3 + downsample shortcut + relu."""
    m, k1 = x.shape
    k2 = xs.shape[1]
    n = w.shape[1]
    m_pad, tm = _row_tiling(m)
    n_pad, tn = _col_tiling(n)

    xb = _pad2d(x, m_pad, k1).astype(jnp.bfloat16)
    wb = _pad2d(w, k1, n_pad).astype(jnp.bfloat16)
    xsb = _pad2d(xs, m_pad, k2).astype(jnp.bfloat16)
    wsb = _pad2d(ws, k2, n_pad).astype(jnp.bfloat16)
    bb = _pad2d(bias.reshape(1, n).astype(jnp.float32), 1, n_pad)

    flops = 2 * m_pad * n_pad * (k1 + k2)
    bytes_accessed = ((xb.size + wb.size + xsb.size + wsb.size) * 2 + bb.size * 4
                      + m_pad * n_pad * jnp.dtype(out_dtype).itemsize)

    out = pl.pallas_call(
        _dual_gemm_bias_relu_kernel,
        out_shape=jax.ShapeDtypeStruct((m_pad, n_pad), out_dtype),
        grid=(m_pad // tm, n_pad // tn),
        in_specs=[
            pl.BlockSpec((tm, k1), lambda i, j: (i, 0)),
            pl.BlockSpec((k1, tn), lambda i, j: (0, j)),
            pl.BlockSpec((tm, k2), lambda i, j: (i, 0)),
            pl.BlockSpec((k2, tn), lambda i, j: (0, j)),
            pl.BlockSpec((1, tn), lambda i, j: (0, j)),
        ],
        out_specs=pl.BlockSpec((tm, tn), lambda i, j: (i, j)),
        compiler_params=_compiler_params(("parallel", "parallel")),
        cost_estimate=pl.CostEstimate(flops=flops, transcendentals=0,
                                      bytes_accessed=bytes_accessed),
    )(xb, wb, xsb, wsb, bb)
    return out[:m, :n]


def gemm_identity_add_relu(x, w, residual, bias, *, out_dtype=jnp.float32):
    """relu(x @ w + bias + residual) — fused conv3+bn3 + identity shortcut + relu."""
    m, k = x.shape
    n = w.shape[1]
    m_pad, tm = _row_tiling(m)
    n_pad, tn = _col_tiling(n)

    xb = _pad2d(x, m_pad, k).astype(jnp.bfloat16)
    wb = _pad2d(w, k, n_pad).astype(jnp.bfloat16)
    rb = _pad2d(residual, m_pad, n_pad).astype(jnp.bfloat16)
    bb = _pad2d(bias.reshape(1, n).astype(jnp.float32), 1, n_pad)

    flops = 2 * m_pad * n_pad * k
    bytes_accessed = ((xb.size + wb.size + rb.size) * 2 + bb.size * 4
                      + m_pad * n_pad * jnp.dtype(out_dtype).itemsize)

    out = pl.pallas_call(
        _gemm_bias_residual_relu_kernel,
        out_shape=jax.ShapeDtypeStruct((m_pad, n_pad), out_dtype),
        grid=(m_pad // tm, n_pad // tn),
        in_specs=[
            pl.BlockSpec((tm, k), lambda i, j: (i, 0)),
            pl.BlockSpec((k, tn), lambda i, j: (0, j)),
            pl.BlockSpec((tm, tn), lambda i, j: (i, j)),
            pl.BlockSpec((1, tn), lambda i, j: (0, j)),
        ],
        out_specs=pl.BlockSpec((tm, tn), lambda i, j: (i, j)),
        compiler_params=_compiler_params(("parallel", "parallel")),
        cost_estimate=pl.CostEstimate(flops=flops, transcendentals=0,
                                      bytes_accessed=bytes_accessed),
    )(xb, wb, rb, bb)
    return out[:m, :n]


# --------------------------------------------------------------------------
# Glue (layout / patch extraction / parameter folding) in plain JAX
# --------------------------------------------------------------------------
def _fold_bn(gamma, beta, mean, var, eps=_BN_EPS):
    scale = gamma / jnp.sqrt(var + eps)
    return scale, beta - mean * scale


def _im2col_3x3(x, stride):
    """x: (N, H, W, C) NHWC (bf16) -> (N*Ho*Wo, 9*C) patches for 3x3 / pad=1 conv."""
    n, h, w, c = x.shape
    xp = jnp.pad(x, ((0, 0), (1, 1), (1, 1), (0, 0)))
    ho = (h - 1) // stride + 1
    wo = (w - 1) // stride + 1
    cols = []
    for kh in range(3):
        for kw in range(3):
            cols.append(xp[:, kh::stride, kw::stride, :][:, :ho, :wo, :])
    patches = jnp.concatenate(cols, axis=-1)  # channel order: (kh, kw, cin)
    return patches.reshape(n * ho * wo, 9 * c), ho, wo


def bottleneck_forward(x_nchw, p, *, stride):
    """Forward pass of the Bottleneck block. Input/output are NCHW (PyTorch)."""
    expansion = 4
    # TODO(synk): in a full NHWC model these boundary transposes disappear.
    x = jnp.transpose(x_nchw, (0, 2, 3, 1)).astype(jnp.float32)  # NCHW -> NHWC
    n, h, w, cin = x.shape
    planes = p["w1"].shape[1]
    out_planes = expansion * planes

    # conv1 (1x1) + bn1 + relu  (BN scale folded into the weight, bias in-kernel)
    s1, b1 = _fold_bn(p["g1"], p["b1"], p["m1"], p["v1"])
    h1 = gemm_bias_act(x.reshape(n * h * w, cin), p["w1"] * s1[None, :], b1,
                       relu=True)
    h1 = h1.reshape(n, h, w, planes)  # bf16 intermediate

    # conv2 (3x3, stride, pad=1) + bn2 + relu — GEMM over bf16 im2col patches.
    # TODO(synk): the 9x patch tensor is still materialized in HBM (in bf16);
    # a per-tap reduction grid axis would remove that traffic entirely.
    s2, b2 = _fold_bn(p["g2"], p["b2"], p["m2"], p["v2"])
    patches, ho, wo = _im2col_3x3(h1, stride)
    w2_mat = p["w2"].reshape(9 * planes, planes) * s2[None, :]
    h2 = gemm_bias_act(patches, w2_mat, b2, relu=True)  # (n*ho*wo, planes) bf16

    # conv3 (1x1) + bn3 + shortcut + relu — one fused Pallas kernel.
    s3, b3 = _fold_bn(p["g3"], p["b3"], p["m3"], p["v3"])
    w3_mat = p["w3"] * s3[None, :]
    if stride != 1 or cin != out_planes:
        ss, bs = _fold_bn(p["gs"], p["bs"], p["ms"], p["vs"])
        xs = x[:, ::stride, ::stride, :][:, :ho, :wo, :].reshape(n * ho * wo, cin)
        out = gemm_projection_add_relu(h2, w3_mat, xs, p["ws"] * ss[None, :],
                                       b3 + bs)
    else:
        residual = x.reshape(n * ho * wo, cin)
        out = gemm_identity_add_relu(h2, w3_mat, residual, b3)

    out = out.reshape(n, ho, wo, out_planes)
    return jnp.transpose(out, (0, 3, 1, 2))  # NHWC -> NCHW


# --------------------------------------------------------------------------
# Pure-JAX reference (for correctness check) and deterministic parameters
# --------------------------------------------------------------------------
def bottleneck_reference(x_nchw, p, *, stride, eps=_BN_EPS):
    x = jnp.transpose(x_nchw, (0, 2, 3, 1)).astype(jnp.float32)
    dn = ("NHWC", "HWIO", "NHWC")

    def bn(y, g, b, m, v):
        return (y - m) * (g / jnp.sqrt(v + eps)) + b

    conv = jax.lax.conv_general_dilated
    h = conv(x, p["w1"][None, None], (1, 1), "VALID", dimension_numbers=dn)
    h = jax.nn.relu(bn(h, p["g1"], p["b1"], p["m1"], p["v1"]))
    h = conv(h, p["w2"], (stride, stride), ((1, 1), (1, 1)), dimension_numbers=dn)
    h = jax.nn.relu(bn(h, p["g2"], p["b2"], p["m2"], p["v2"]))
    h = conv(h, p["w3"][None, None], (1, 1), "VALID", dimension_numbers=dn)
    h = bn(h, p["g3"], p["b3"], p["m3"], p["v3"])
    if stride != 1 or x.shape[-1] != p["w3"].shape[1]:
        s = conv(x, p["ws"][None, None], (stride, stride), "VALID",
                 dimension_numbers=dn)
        s = bn(s, p["gs"], p["bs"], p["ms"], p["vs"])
    else:
        s = x
    return jnp.transpose(jax.nn.relu(h + s), (0, 3, 1, 2))


def init_params(key, in_planes, planes):
    expansion = 4
    out_planes = expansion * planes
    keys = jax.random.split(key, 8)

    def conv_w(k, shape):
        fan_in = 1
        for d in shape[:-1]:
            fan_in *= d
        return jax.random.normal(k, shape, jnp.float32) / jnp.sqrt(float(fan_in))

    def bn_p(k, c):
        k1, k2, k3, k4 = jax.random.split(k, 4)
        g = 0.5 + jax.random.uniform(k1, (c,), jnp.float32)
        b = 0.1 * jax.random.normal(k2, (c,), jnp.float32)
        m = 0.1 * jax.random.normal(k3, (c,), jnp.float32)
        v = 0.5 + jax.random.uniform(k4, (c,), jnp.float32)
        return g, b, m, v

    # Conv weights are stored channels-last: 1x1 as (Cin, Cout), 3x3 as
    # (kh, kw, Cin, Cout).  (PyTorch stores (Cout, Cin, kh, kw); same math.)
    p = {
        "w1": conv_w(keys[0], (in_planes, planes)),
        "w2": conv_w(keys[1], (3, 3, planes, planes)),
        "w3": conv_w(keys[2], (planes, out_planes)),
        "ws": conv_w(keys[3], (in_planes, out_planes)),
    }
    for tag, kk, c in (("1", keys[4], planes), ("2", keys[5], planes),
                       ("3", keys[6], out_planes), ("s", keys[7], out_planes)):
        p["g" + tag], p["b" + tag], p["m" + tag], p["v" + tag] = bn_p(kk, c)
    return p


if __name__ == "__main__":
    key = jax.random.PRNGKey(0)
    fwd = jax.jit(bottleneck_forward, static_argnames=("stride",))

    # (in_planes, planes, stride, N, H, W): projection and identity shortcuts.
    configs = [
        (64, 16, 2, 2, 8, 8),   # downsample (projection) shortcut
        (64, 16, 1, 2, 8, 8),   # identity shortcut (in_planes == 4*planes)
    ]
    for idx, (in_planes, planes, stride, n, h, w) in enumerate(configs):
        kx, kp, key = jax.random.split(key, 3)
        x = jax.random.normal(kx, (n, in_planes, h, w), jnp.float32)  # NCHW
        params = init_params(kp, in_planes, planes)

        out = jax.block_until_ready(fwd(x, params, stride=stride))
        ho = (h - 1) // stride + 1
        wo = (w - 1) // stride + 1
        assert out.shape == (n, 4 * planes, ho, wo), out.shape

        ref = bottleneck_reference(x, params, stride=stride)
        max_err = float(jnp.max(jnp.abs(out - ref)))
        scale = float(jnp.max(jnp.abs(ref))) + 1.0
        assert max_err < 3e-2 * scale, (idx, max_err, scale)

    print("KERNEL_OK")
</pallas_src>

<mosaic_0001>
module attributes {stable_mosaic.version = 11 : i64} {
  func.func @_gemm_bias_act_kernel(%arg0: i32, %arg1: i32, %arg2: i32, %arg3: memref<128x64xbf16, #tpu.memory_space<vmem>>, %arg4: memref<64x128xbf16, #tpu.memory_space<vmem>>, %arg5: memref<1x128xf32, #tpu.memory_space<vmem>>, %arg6: memref<128x128xbf16, #tpu.memory_space<vmem>>, %arg7: memref<128x128xf32, #tpu.memory_space<vmem>>) attributes {dimension_semantics = [#tpu.dimension_semantics<parallel>, #tpu.dimension_semantics<parallel>, #tpu.dimension_semantics<arbitrary>], iteration_bounds = array<i64: 1, 1, 1>, scalar_prefetch = 0 : i64, scratch_operands = 1 : i64, tpu.core_type = #tpu.core_type<tc>, window_params = [{transform_indices = @transform_0, window_bounds = array<i64: 128, 64>}, {transform_indices = @transform_1, window_bounds = array<i64: 64, 128>}, {transform_indices = @transform_2, window_bounds = array<i64: 1, 128>}, {transform_indices = @transform_3, window_bounds = array<i64: 128, 128>}]} {
    %c0_i32 = arith.constant 0 : i32
    %0 = arith.cmpi eq, %arg2, %c0_i32 : i32
    %1 = arith.extui %0 : i1 to i32
    %c0_i32_0 = arith.constant 0 : i32
    %2 = arith.cmpi ne, %1, %c0_i32_0 : i32
    scf.if %2 {
      %cst_10 = arith.constant 0.000000e+00 : f32
      %12 = vector.broadcast %cst_10 : f32 to vector<128x128xf32>
      %c0_11 = arith.constant 0 : index
      %c0_12 = arith.constant 0 : index
      %13 = vector.load %arg7[%c0_11, %c0_12] : memref<128x128xf32, #tpu.memory_space<vmem>>, vector<128x128xf32>
      tpu.vector_store %arg7[%c0_11, %c0_12], %12 {strides = array<i32>} : memref<128x128xf32, #tpu.memory_space<vmem>>, vector<128x128xf32>,
    } else {
    }
    %c0 = arith.constant 0 : index
    %c0_1 = arith.constant 0 : index
    %3 = vector.load %arg7[%c0, %c0_1] : memref<128x128xf32, #tpu.memory_space<vmem>>, vector<128x128xf32>
    %c0_2 = arith.constant 0 : index
    %c0_3 = arith.constant 0 : index
    %4 = vector.load %arg3[%c0_2, %c0_3] : memref<128x64xbf16, #tpu.memory_space<vmem>>, vector<128x64xbf16>
    %c0_4 = arith.constant 0 : index
    %c0_5 = arith.constant 0 : index
    %5 = vector.load %arg4[%c0_4, %c0_5] : memref<64x128xbf16, #tpu.memory_space<vmem>>, vector<64x128xbf16>
    %cst = arith.constant dense<0.000000e+00> : vector<128x128xf32>
    %6 = tpu.matmul %4, %5, %cst {dimension_numbers = #tpu.dot_dimension_numbers<[1], [0], [0], [1], [0, 0, 1, 1], [], []>} : vector<128x64xbf16>, vector<64x128xbf16>, vector<128x128xf32> -> vector<128x128xf32>
    %7 = arith.addf %3, %6 : vector<128x128xf32>
    %c0_6 = arith.constant 0 : index
    %c0_7 = arith.constant 0 : index
    %8 = vector.load %arg7[%c0_6, %c0_7] : memref<128x128xf32, #tpu.memory_space<vmem>>, vector<128x128xf32>
    tpu.vector_store %arg7[%c0_6, %c0_7], %7 {strides = array<i32>} : memref<128x128xf32, #tpu.memory_space<vmem>>, vector<128x128xf32>,
    %c0_i32_8 = arith.constant 0 : i32
    %9 = arith.cmpi eq, %arg2, %c0_i32_8 : i32
    %10 = arith.extui %9 : i1 to i32
    %c0_i32_9 = arith.constant 0 : i32
    %11 = arith.cmpi ne, %10, %c0_i32_9 : i32
    scf.if %11 {
      %c0_10 = arith.constant 0 : index
      %c0_11 = arith.constant 0 : index
      %12 = vector.load %arg7[%c0_10, %c0_11] : memref<128x128xf32, #tpu.memory_space<vmem>>, vector<128x128xf32>
      %c0_12 = arith.constant 0 : index
      %c0_13 = arith.constant 0 : index
      %13 = vector.load %arg5[%c0_12, %c0_13] : memref<1x128xf32, #tpu.memory_space<vmem>>, vector<1x128xf32>
      %14 = vector.broadcast %13 : vector<1x128xf32> to vector<128x128xf32>
      %15 = arith.addf %12, %14 : vector<128x128xf32>
      %cst_14 = arith.constant 0.000000e+00 : f32
      %16 = vector.broadcast %cst_14 : f32 to vector<128x128xf32>
      %17 = arith.maximumf %15, %16 : vector<128x128xf32>
      %18 = arith.truncf %17 : vector<128x128xf32> to vector<128x128xbf16>
      %c0_15 = arith.constant 0 : index
      %c0_16 = arith.constant 0 : index
      %19 = vector.load %arg6[%c0_15, %c0_16] : memref<128x128xbf16, #tpu.memory_space<vmem>>, vector<128x128xbf16>
      tpu.vector_store %arg6[%c0_15, %c0_16], %18 {strides = array<i32>} : memref<128x128xbf16, #tpu.memory_space<vmem>>, vector<128x128xbf16>,
    } else {
    }
    return
  }
  func.func @transform_0(%arg0: i32, %arg1: i32, %arg2: i32) -> (i32, i32) {
    %c0_i32 = arith.constant 0 : i32
    return %arg0, %arg2 : i32, i32
  }
  func.func @transform_1(%arg0: i32, %arg1: i32, %arg2: i32) -> (i32, i32) {
    %c0_i32 = arith.constant 0 : i32
    return %arg2, %arg1 : i32, i32
  }
  func.func @transform_2(%arg0: i32, %arg1: i32, %arg2: i32) -> (i32, i32) {
    %c0_i32 = arith.constant 0 : i32
    %c0_i32_0 = arith.constant 0 : i32
    return %c0_i32, %arg1 : i32, i32
  }
  func.func @transform_3(%arg0: i32, %arg1: i32, %arg2: i32) -> (i32, i32) {
    %c0_i32 = arith.constant 0 : i32
    return %arg0, %arg1 : i32, i32
  }
}

module attributes {stable_mosaic.version = 11 : i64} {
  func.func @_gemm_bias_act_kernel(%arg0: i32, %arg1: i32, %arg2: i32, %arg3: memref<32x144xbf16, #tpu.memory_space<vmem>>, %arg4: memref<144x128xbf16, #tpu.memory_space<vmem>>, %arg5: memref<1x128xf32, #tpu.memory_space<vmem>>, %arg6: memref<32x128xbf16, #tpu.memory_space<vmem>>, %arg7: memref<32x128xf32, #tpu.memory_space<vmem>>) attributes {dimension_semantics = [#tpu.dimension_semantics<parallel>, #tpu.dimension_semantics<parallel>, #tpu.dimension_semantics<arbitrary>], iteration_bounds = array<i64: 1, 1, 1>, scalar_prefetch = 0 : i64, scratch_operands = 1 : i64, tpu.core_type = #tpu.core_type<tc>, window_params = [{transform_indices = @transform_0, window_bounds = array<i64: 32, 144>}, {transform_indices = @transform_1, window_bounds = array<i64: 144, 128>}, {transform_indices = @transform_2, window_bounds = array<i64: 1, 128>}, {transform_indices = @transform_3, window_bounds = array<i64: 32, 128>}]} {
    %c0_i32 = arith.constant 0 : i32
    %0 = arith.cmpi eq, %arg2, %c0_i32 : i32
    %1 = arith.extui %0 : i1 to i32
    %c0_i32_0 = arith.constant 0 : i32
    %2 = arith.cmpi ne, %1, %c0_i32_0 : i32
    scf.if %2 {
      %cst_10 = arith.constant 0.000000e+00 : f32
      %12 = vector.broadcast %cst_10 : f32 to vector<32x128xf32>
      %c0_11 = arith.constant 0 : index
      %c0_12 = arith.constant 0 : index
      %13 = vector.load %arg7[%c0_11, %c0_12] : memref<32x128xf32, #tpu.memory_space<vmem>>, vector<32x128xf32>
      tpu.vector_store %arg7[%c0_11, %c0_12], %12 {strides = array<i32>} : memref<32x128xf32, #tpu.memory_space<vmem>>, vector<32x128xf32>,
    } else {
    }
    %c0 = arith.constant 0 : index
    %c0_1 = arith.constant 0 : index
    %3 = vector.load %arg7[%c0, %c0_1] : memref<32x128xf32, #tpu.memory_space<vmem>>, vector<32x128xf32>
    %c0_2 = arith.constant 0 : index
    %c0_3 = arith.constant 0 : index
    %4 = vector.load %arg3[%c0_2, %c0_3] : memref<32x144xbf16, #tpu.memory_space<vmem>>, vector<32x144xbf16>
    %c0_4 = arith.constant 0 : index
    %c0_5 = arith.constant 0 : index
    %5 = vector.load %arg4[%c0_4, %c0_5] : memref<144x128xbf16, #tpu.memory_space<vmem>>, vector<144x128xbf16>
    %cst = arith.constant dense<0.000000e+00> : vector<32x128xf32>
    %6 = tpu.matmul %4, %5, %cst {dimension_numbers = #tpu.dot_dimension_numbers<[1], [0], [0], [1], [0, 0, 1, 1], [], []>} : vector<32x144xbf16>, vector<144x128xbf16>, vector<32x128xf32> -> vector<32x128xf32>
    %7 = arith.addf %3, %6 : vector<32x128xf32>
    %c0_6 = arith.constant 0 : index
    %c0_7 = arith.constant 0 : index
    %8 = vector.load %arg7[%c0_6, %c0_7] : memref<32x128xf32, #tpu.memory_space<vmem>>, vector<32x128xf32>
    tpu.vector_store %arg7[%c0_6, %c0_7], %7 {strides = array<i32>} : memref<32x128xf32, #tpu.memory_space<vmem>>, vector<32x128xf32>,
    %c0_i32_8 = arith.constant 0 : i32
    %9 = arith.cmpi eq, %arg2, %c0_i32_8 : i32
    %10 = arith.extui %9 : i1 to i32
    %c0_i32_9 = arith.constant 0 : i32
    %11 = arith.cmpi ne, %10, %c0_i32_9 : i32
    scf.if %11 {
      %c0_10 = arith.constant 0 : index
      %c0_11 = arith.constant 0 : index
      %12 = vector.load %arg7[%c0_10, %c0_11] : memref<32x128xf32, #tpu.memory_space<vmem>>, vector<32x128xf32>
      %c0_12 = arith.constant 0 : index
      %c0_13 = arith.constant 0 : index
      %13 = vector.load %arg5[%c0_12, %c0_13] : memref<1x128xf32, #tpu.memory_space<vmem>>, vector<1x128xf32>
      %14 = vector.broadcast %13 : vector<1x128xf32> to vector<32x128xf32>
      %15 = arith.addf %12, %14 : vector<32x128xf32>
      %cst_14 = arith.constant 0.000000e+00 : f32
      %16 = vector.broadcast %cst_14 : f32 to vector<32x128xf32>
      %17 = arith.maximumf %15, %16 : vector<32x128xf32>
      %18 = arith.truncf %17 : vector<32x128xf32> to vector<32x128xbf16>
      %c0_15 = arith.constant 0 : index
      %c0_16 = arith.constant 0 : index
      %19 = vector.load %arg6[%c0_15, %c0_16] : memref<32x128xbf16, #tpu.memory_space<vmem>>, vector<32x128xbf16>
      tpu.vector_store %arg6[%c0_15, %c0_16], %18 {strides = array<i32>} : memref<32x128xbf16, #tpu.memory_space<vmem>>, vector<32x128xbf16>,
    } else {
    }
    return
  }
  func.func @transform_0(%arg0: i32, %arg1: i32, %arg2: i32) -> (i32, i32) {
    %c0_i32 = arith.constant 0 : i32
    return %arg0, %arg2 : i32, i32
  }
  func.func @transform_1(%arg0: i32, %arg1: i32, %arg2: i32) -> (i32, i32) {
    %c0_i32 = arith.constant 0 : i32
    return %arg2, %arg1 : i32, i32
  }
  func.func @transform_2(%arg0: i32, %arg1: i32, %arg2: i32) -> (i32, i32) {
    %c0_i32 = arith.constant 0 : i32
    %c0_i32_0 = arith.constant 0 : i32
    return %c0_i32, %arg1 : i32, i32
  }
  func.func @transform_3(%arg0: i32, %arg1: i32, %arg2: i32) -> (i32, i32) {
    %c0_i32 = arith.constant 0 : i32
    return %arg0, %arg1 : i32, i32
  }
}

module attributes {stable_mosaic.version = 11 : i64} {
  func.func @_dual_gemm_bias_relu_kernel(%arg0: i32, %arg1: i32, %arg2: memref<32x16xbf16, #tpu.memory_space<vmem>>, %arg3: memref<16x128xbf16, #tpu.memory_space<vmem>>, %arg4: memref<32x64xbf16, #tpu.memory_space<vmem>>, %arg5: memref<64x128xbf16, #tpu.memory_space<vmem>>, %arg6: memref<1x128xf32, #tpu.memory_space<vmem>>, %arg7: memref<32x128xf32, #tpu.memory_space<vmem>>) attributes {dimension_semantics = [#tpu.dimension_semantics<parallel>, #tpu.dimension_semantics<parallel>], iteration_bounds = array<i64: 1, 1>, scalar_prefetch = 0 : i64, scratch_operands = 0 : i64, tpu.core_type = #tpu.core_type<tc>, window_params = [{transform_indices = @transform_0, window_bounds = array<i64: 32, 16>}, {transform_indices = @transform_1, window_bounds = array<i64: 16, 128>}, {transform_indices = @transform_2, window_bounds = array<i64: 32, 64>}, {transform_indices = @transform_3, window_bounds = array<i64: 64, 128>}, {transform_indices = @transform_4, window_bounds = array<i64: 1, 128>}, {transform_indices = @transform_5, window_bounds = array<i64: 32, 128>}]} {
    %c0 = arith.constant 0 : index
    %c0_0 = arith.constant 0 : index
    %0 = vector.load %arg2[%c0, %c0_0] : memref<32x16xbf16, #tpu.memory_space<vmem>>, vector<32x16xbf16>
    %c0_1 = arith.constant 0 : index
    %c0_2 = arith.constant 0 : index
    %1 = vector.load %arg3[%c0_1, %c0_2] : memref<16x128xbf16, #tpu.memory_space<vmem>>, vector<16x128xbf16>
    %cst = arith.constant dense<0.000000e+00> : vector<32x128xf32>
    %2 = tpu.matmul %0, %1, %cst {dimension_numbers = #tpu.dot_dimension_numbers<[1], [0], [0], [1], [0, 0, 1, 1], [], []>} : vector<32x16xbf16>, vector<16x128xbf16>, vector<32x128xf32> -> vector<32x128xf32>
    %c0_3 = arith.constant 0 : index
    %c0_4 = arith.constant 0 : index
    %3 = vector.load %arg4[%c0_3, %c0_4] : memref<32x64xbf16, #tpu.memory_space<vmem>>, vector<32x64xbf16>
    %c0_5 = arith.constant 0 : index
    %c0_6 = arith.constant 0 : index
    %4 = vector.load %arg5[%c0_5, %c0_6] : memref<64x128xbf16, #tpu.memory_space<vmem>>, vector<64x128xbf16>
    %cst_7 = arith.constant dense<0.000000e+00> : vector<32x128xf32>
    %5 = tpu.matmul %3, %4, %cst_7 {dimension_numbers = #tpu.dot_dimension_numbers<[1], [0], [0], [1], [0, 0, 1, 1], [], []>} : vector<32x64xbf16>, vector<64x128xbf16>, vector<32x128xf32> -> vector<32x128xf32>
    %6 = arith.addf %2, %5 : vector<32x128xf32>
    %c0_8 = arith.constant 0 : index
    %c0_9 = arith.constant 0 : index
    %7 = vector.load %arg6[%c0_8, %c0_9] : memref<1x128xf32, #tpu.memory_space<vmem>>, vector<1x128xf32>
    %8 = vector.broadcast %7 : vector<1x128xf32> to vector<32x128xf32>
    %9 = arith.addf %6, %8 : vector<32x128xf32>
    %cst_10 = arith.constant 0.000000e+00 : f32
    %10 = vector.broadcast %cst_10 : f32 to vector<32x128xf32>
    %11 = arith.maximumf %9, %10 : vector<32x128xf32>
    %c0_11 = arith.constant 0 : index
    %c0_12 = arith.constant 0 : index
    %12 = vector.load %arg7[%c0_11, %c0_12] : memref<32x128xf32, #tpu.memory_space<vmem>>, vector<32x128xf32>
    tpu.vector_store %arg7[%c0_11, %c0_12], %11 {strides = array<i32>} : memref<32x128xf32, #tpu.memory_space<vmem>>, vector<32x128xf32>,
    return
  }
  func.func @transform_0(%arg0: i32, %arg1: i32) -> (i32, i32) {
    %c0_i32 = arith.constant 0 : i32
    %c0_i32_0 = arith.constant 0 : i32
    return %arg0, %c0_i32 : i32, i32
  }
  func.func @transform_1(%arg0: i32, %arg1: i32) -> (i32, i32) {
    %c0_i32 = arith.constant 0 : i32
    %c0_i32_0 = arith.constant 0 : i32
    return %c0_i32, %arg1 : i32, i32
  }
  func.func @transform_2(%arg0: i32, %arg1: i32) -> (i32, i32) {
    %c0_i32 = arith.constant 0 : i32
    %c0_i32_0 = arith.constant 0 : i32
    return %arg0, %c0_i32 : i32, i32
  }
  func.func @transform_3(%arg0: i32, %arg1: i32) -> (i32, i32) {
    %c0_i32 = arith.constant 0 : i32
    %c0_i32_0 = arith.constant 0 : i32
    return %c0_i32, %arg1 : i32, i32
  }
  func.func @transform_4(%arg0: i32, %arg1: i32) -> (i32, i32) {
    %c0_i32 = arith.constant 0 : i32
    %c0_i32_0 = arith.constant 0 : i32
    return %c0_i32, %arg1 : i32, i32
  }
  func.func @transform_5(%arg0: i32, %arg1: i32) -> (i32, i32) {
    %c0_i32 = arith.constant 0 : i32
    return %arg0, %arg1 : i32, i32
  }
}

</mosaic_0001>

<llo_original>
// kernel: bottleneck_forward.3
$region0: #{bottleneck_forward.3}
  #allocation0 [shape = 'u32[]', space=smem, size = 0x4, offset = 0x4, fixed_abs, tag = 'smem constant byte address 0x4 - core index']
  #allocation1 [shape = 'u32[72,128]{1,0:T(1,128)}', space=vmem, size = 0x9000, scoped, tag = 'internal scratch']
  #allocation2 [shape = 'f32[128,128]{1,0:T(8,128)}', space=vmem, size = 0x10000, scoped, tag = 'scratch operand']
  %s0 = inlined_call_operand.vmem [shape: bf16[128,64], index: 0, kind: input, shape index: {}]
  %s1 = inlined_call_operand.vmem [shape: bf16[64,128], index: 1, kind: input, shape index: {}]
  %s2 = inlined_call_operand.vmem [shape: f32[1,128], index: 2, kind: input, shape index: {}]
  %s3 = inlined_call_operand.vmem [shape: bf16[128,128], index: 3, kind: output, shape index: {}]
  %s4 = sld [smem:[#allocation0]]
  $region30: #{bottleneck_forward.3} parent=0
    _
  %s6 = ssub.s32 1, %s4
  %s7 = scalar_select 0, %s6, %s4
  // Predicated region
  $region2: #{bottleneck_forward.3} parent=0 // pred_check
    _
  $region3: #{bottleneck_forward.3} parent=0 // pred_check_branch
    %9 = sbr.rel (0) target = $region5
  $region4: #{bottleneck_forward.3} parent=0 // pred_region
    _
  $region5: #{bottleneck_forward.3} parent=0 // pred_fallthru
    _
  // Predicated region
  $region6: #{bottleneck_forward.3} parent=0 // pred_check
    _
  $region7: #{bottleneck_forward.3} parent=0 // pred_check_branch
    %11 = sbr.rel (0) target = $region9
  $region8: #{bottleneck_forward.3} parent=0 // pred_region
    _
  $region9: #{bottleneck_forward.3} parent=0 // pred_fallthru
    _
  // Predicated region
  $region10: #{bottleneck_forward.3} parent=0 // pred_check
    _
  $region11: #{bottleneck_forward.3} parent=0 // pred_check_branch
    %13 = sbr.rel (0) target = $region13
  $region12: #{bottleneck_forward.3} parent=0 // pred_region
    _
  $region13: #{bottleneck_forward.3} parent=0 // pred_fallthru
    _
  %p15 = scmp.eq.s32.totalorder 0, 0
  // Predicated region
  $region14: #{bottleneck_forward.3} parent=0 // pred_check
    %p16 = pneg %p15
  $region15: #{bottleneck_forward.3} parent=0 // pred_check_branch
    %18 = sbr.rel (%p16) target = $region17
  $region16: #{bottleneck_forward.3} parent=0 // pred_region
    %19 = vst [vmem:[#allocation2] sm:$0xff] 0.0
    %20 = vst [vmem:[#allocation2 + $0x8] sm:$0xff] 0.0
    %21 = vst [vmem:[#allocation2 + $0x10] sm:$0xff] 0.0
    %22 = vst [vmem:[#allocation2 + $0x18] sm:$0xff] 0.0
    %23 = vst [vmem:[#allocation2 + $0x20] sm:$0xff] 0.0
    %24 = vst [vmem:[#allocation2 + $0x28] sm:$0xff] 0.0
    %25 = vst [vmem:[#allocation2 + $0x30] sm:$0xff] 0.0
    %26 = vst [vmem:[#allocation2 + $0x38] sm:$0xff] 0.0
    %27 = vst [vmem:[#allocation2 + $0x40] sm:$0xff] 0.0
    %28 = vst [vmem:[#allocation2 + $0x48] sm:$0xff] 0.0
    %29 = vst [vmem:[#allocation2 + $0x50] sm:$0xff] 0.0
    %30 = vst [vmem:[#allocation2 + $0x58] sm:$0xff] 0.0
    %31 = vst [vmem:[#allocation2 + $0x60] sm:$0xff] 0.0
    %32 = vst [vmem:[#allocation2 + $0x68] sm:$0xff] 0.0
    %33 = vst [vmem:[#allocation2 + $0x70] sm:$0xff] 0.0
    %34 = vst [vmem:[#allocation2 + $0x78] sm:$0xff] 0.0
  $region17: #{bottleneck_forward.3} parent=0 // pred_fallthru
    _
  %v35 = vld [vmem:[#allocation2] sm:$0xff]
  %v36 = vld [vmem:[#allocation2 + $0x8] sm:$0xff]
  %v37 = vld [vmem:[#allocation2 + $0x10] sm:$0xff]
  %v38 = vld [vmem:[#allocation2 + $0x18] sm:$0xff]
  %v39 = vld [vmem:[#allocation2 + $0x20] sm:$0xff]
  %v40 = vld [vmem:[#allocation2 + $0x28] sm:$0xff]
  %v41 = vld [vmem:[#allocation2 + $0x30] sm:$0xff]
  %v42 = vld [vmem:[#allocation2 + $0x38] sm:$0xff]
  %v43 = vld [vmem:[#allocation2 + $0x40] sm:$0xff]
  %v44 = vld [vmem:[#allocation2 + $0x48] sm:$0xff]
  %v45 = vld [vmem:[#allocation2 + $0x50] sm:$0xff]
  %v46 = vld [vmem:[#allocation2 + $0x58] sm:$0xff]
  %v47 = vld [vmem:[#allocation2 + $0x60] sm:$0xff]
  %v48 = vld [vmem:[#allocation2 + $0x68] sm:$0xff]
  %v49 = vld [vmem:[#allocation2 + $0x70] sm:$0xff]
  %v50 = vld [vmem:[#allocation2 + $0x78] sm:$0xff]
  %v51 = vld [vmem:[%s0] sm:$0xf]
  %v52 = vld [vmem:[%s0 + $0x4] sm:$0xf]
  %v53 = vld [vmem:[%s0 + $0x8] sm:$0xf]
  %v54 = vld [vmem:[%s0 + $0xc] sm:$0xf]
  %v55 = vld [vmem:[%s0 + $0x10] sm:$0xf]
  %v56 = vld [vmem:[%s0 + $0x14] sm:$0xf]
  %v57 = vld [vmem:[%s0 + $0x18] sm:$0xf]
  %v58 = vld [vmem:[%s0 + $0x1c] sm:$0xf]
  %v59 = vld [vmem:[%s0 + $0x20] sm:$0xf]
  %v60 = vld [vmem:[%s0 + $0x24] sm:$0xf]
  %v61 = vld [vmem:[%s0 + $0x28] sm:$0xf]
  %v62 = vld [vmem:[%s0 + $0x2c] sm:$0xf]
  %v63 = vld [vmem:[%s0 + $0x30] sm:$0xf]
  %v64 = vld [vmem:[%s0 + $0x34] sm:$0xf]
  %v65 = vld [vmem:[%s0 + $0x38] sm:$0xf]
  %v66 = vld [vmem:[%s0 + $0x3c] sm:$0xf]
  %v67 = vld [vmem:[%s1] sm:$0xf]
  %v68 = vld [vmem:[%s1 + $0x4] sm:$0xf]
  %v69 = vld [vmem:[%s1 + $0x8] sm:$0xf]
  %v70 = vld [vmem:[%s1 + $0xc] sm:$0xf]
  %v71 = vld [vmem:[%s1 + $0x10] sm:$0xf]
  %v72 = vld [vmem:[%s1 + $0x14] sm:$0xf]
  %v73 = vld [vmem:[%s1 + $0x18] sm:$0xf]
  %v74 = vld [vmem:[%s1 + $0x1c] sm:$0xf]
  %v91 = vunpack.c.l.b16 %v51
  %v92 = vunpack.c.l.b16 %v52
  %v93 = vunpack.c.l.b16 %v53
  %v94 = vunpack.c.l.b16 %v54
  %v95 = vunpack.c.l.b16 %v55
  %v96 = vunpack.c.l.b16 %v56
  %v97 = vunpack.c.l.b16 %v57
  %v98 = vunpack.c.l.b16 %v58
  %v99 = vunpack.c.l.b16 %v59
  %v100 = vunpack.c.l.b16 %v60
  %v101 = vunpack.c.l.b16 %v61
  %v102 = vunpack.c.l.b16 %v62
  %v103 = vunpack.c.l.b16 %v63
  %v104 = vunpack.c.l.b16 %v64
  %v105 = vunpack.c.l.b16 %v65
  %v106 = vunpack.c.l.b16 %v66
  %v107 = vpack.c.b16 %v92, %v91
  %v108 = vpack.c.b16 %v94, %v93
  %v109 = vpack.c.b16 %v96, %v95
  %v110 = vpack.c.b16 %v98, %v97
  %v111 = vpack.c.b16 %v100, %v99
  %v112 = vpack.c.b16 %v102, %v101
  %v113 = vpack.c.b16 %v104, %v103
  %v114 = vpack.c.b16 %v106, %v105
  %v123 = vunpack.c.l.b16 %v67
  %v124 = vunpack.c.l.b16 %v68
  %v125 = vunpack.c.l.b16 %v69
  %v126 = vunpack.c.l.b16 %v70
  %v127 = vunpack.c.l.b16 %v71
  %v128 = vunpack.c.l.b16 %v72
  %v129 = vunpack.c.l.b16 %v73
  %v130 = vunpack.c.l.b16 %v74
  %v131 = vpack.c.b16 %v124, %v123
  %v132 = vpack.c.b16 %v126, %v125
  %v133 = vpack.c.b16 %v128, %v127
  %v134 = vpack.c.b16 %v130, %v129
  %vm139 = vcmask 523264
  %v141 = vsel %vm139, %v107, 0
  %v144 = vsel %vm139, %v108, 0
  %v147 = vsel %vm139, %v109, 0
  %v150 = vsel %vm139, %v110, 0
  %v153 = vsel %vm139, %v111, 0
  %v156 = vsel %vm139, %v112, 0
  %v159 = vsel %vm139, %v113, 0
  %v162 = vsel %vm139, %v114, 0
  %164 = vmatpush.bf16.msra.mxu0 0
  %165 = vmatpush.bf16.msra.mxu0 0
  %166 = vmatpush.bf16.msra.mxu0 0
  %167 = vmatpush.bf16.msra.mxu0 0
  %168 = vmatpush.bf16.msra.mxu0 %v134
  %169 = vmatpush.bf16.msra.mxu0 %v133
  %170 = vmatpush.bf16.msra.mxu0 %v132
  %171 = vmatpush.bf16.msra.mxu0 %v131
  %172 = vmatmul.bf16.gmra.mxu0 %v141
  %v173 = vpop.f32.mrf.mxu0
  %v174 = vadd.f32 0.0, %v173
  %v175 = vpop.f32.mrf.mxu0
  %v176 = vadd.f32 0.0, %v175
  %177 = vmatmul.bf16.gmra.mxu0 %v144
  %v178 = vpop.f32.mrf.mxu0
  %v179 = vadd.f32 0.0, %v178
  %v180 = vpop.f32.mrf.mxu0
  %v181 = vadd.f32 0.0, %v180
  %182 = vmatmul.bf16.gmra.mxu0 %v147
  %v183 = vpop.f32.mrf.mxu0
  %v184 = vadd.f32 0.0, %v183
  %v185 = vpop.f32.mrf.mxu0
  %v186 = vadd.f32 0.0, %v185
  %187 = vmatmul.bf16.gmra.mxu0 %v150
  %v188 = vpop.f32.mrf.mxu0
  %v189 = vadd.f32 0.0, %v188
  %v190 = vpop.f32.mrf.mxu0
  %v191 = vadd.f32 0.0, %v190
  %192 = vmatmul.bf16.gmra.mxu0 %v153
  %v193 = vpop.f32.mrf.mxu0
  %v194 = vadd.f32 0.0, %v193
  %v195 = vpop.f32.mrf.mxu0
  %v196 = vadd.f32 0.0, %v195
  %197 = vmatmul.bf16.gmra.mxu0 %v156
  %v198 = vpop.f32.mrf.mxu0
  %v199 = vadd.f32 0.0, %v198
  %v200 = vpop.f32.mrf.mxu0
  %v201 = vadd.f32 0.0, %v200
  %202 = vmatmul.bf16.gmra.mxu0 %v159
  %v203 = vpop.f32.mrf.mxu0
  %v204 = vadd.f32 0.0, %v203
  %v205 = vpop.f32.mrf.mxu0
  %v206 = vadd.f32 0.0, %v205
  %207 = vmatmul.bf16.gmra.mxu0 %v162
  %v208 = vpop.f32.mrf.mxu0
  %v209 = vadd.f32 0.0, %v208
  %v210 = vpop.f32.mrf.mxu0
  %v211 = vadd.f32 0.0, %v210
  %212 = vdwg.mxu0
  %v213 = vadd.f32 %v35, %v174
  %v214 = vadd.f32 %v36, %v176
  %v215 = vadd.f32 %v37, %v179
  %v216 = vadd.f32 %v38, %v181
  %v217 = vadd.f32 %v39, %v184
  %v218 = vadd.f32 %v40, %v186
  %v219 = vadd.f32 %v41, %v189
  %v220 = vadd.f32 %v42, %v191
  %v221 = vadd.f32 %v43, %v194
  %v222 = vadd.f32 %v44, %v196
  %v223 = vadd.f32 %v45, %v199
  %v224 = vadd.f32 %v46, %v201
  %v225 = vadd.f32 %v47, %v204
  %v226 = vadd.f32 %v48, %v206
  %v227 = vadd.f32 %v49, %v209
  %v228 = vadd.f32 %v50, %v211
  %229 = vst [vmem:[#allocation2] sm:$0xff] %v213
  %230 = vst [vmem:[#allocation2 + $0x8] sm:$0xff] %v214
  %231 = vst [vmem:[#allocation2 + $0x10] sm:$0xff] %v215
  %232 = vst [vmem:[#allocation2 + $0x18] sm:$0xff] %v216
  %233 = vst [vmem:[#allocation2 + $0x20] sm:$0xff] %v217
  %234 = vst [vmem:[#allocation2 + $0x28] sm:$0xff] %v218
  %235 = vst [vmem:[#allocation2 + $0x30] sm:$0xff] %v219
  %236 = vst [vmem:[#allocation2 + $0x38] sm:$0xff] %v220
  %237 = vst [vmem:[#allocation2 + $0x40] sm:$0xff] %v221
  %238 = vst [vmem:[#allocation2 + $0x48] sm:$0xff] %v222
  %239 = vst [vmem:[#allocation2 + $0x50] sm:$0xff] %v223
  %240 = vst [vmem:[#allocation2 + $0x58] sm:$0xff] %v224
  %241 = vst [vmem:[#allocation2 + $0x60] sm:$0xff] %v225
  %242 = vst [vmem:[#allocation2 + $0x68] sm:$0xff] %v226
  %243 = vst [vmem:[#allocation2 + $0x70] sm:$0xff] %v227
  %244 = vst [vmem:[#allocation2 + $0x78] sm:$0xff] %v228
  // Predicated region
  $region18: #{bottleneck_forward.3} parent=0 // pred_check
    %p245 = pneg %p15
  $region19: #{bottleneck_forward.3} parent=0 // pred_check_branch
    %247 = sbr.rel (%p245) target = $region21
  $region20: #{bottleneck_forward.3} parent=0 // pred_region
    %v248 = vld [vmem:[#allocation2] sm:$0xff]
    %v249 = vld [vmem:[#allocation2 + $0x8] sm:$0xff]
    %v250 = vld [vmem:[#allocation2 + $0x10] sm:$0xff]
    %v251 = vld [vmem:[#allocation2 + $0x18] sm:$0xff]
    %v252 = vld [vmem:[#allocation2 + $0x20] sm:$0xff]
    %v253 = vld [vmem:[#allocation2 + $0x28] sm:$0xff]
    %v254 = vld [vmem:[#allocation2 + $0x30] sm:$0xff]
    %v255 = vld [vmem:[#allocation2 + $0x38] sm:$0xff]
    %v256 = vld [vmem:[#allocation2 + $0x40] sm:$0xff]
    %v257 = vld [vmem:[#allocation2 + $0x48] sm:$0xff]
    %v258 = vld [vmem:[#allocation2 + $0x50] sm:$0xff]
    %v259 = vld [vmem:[#allocation2 + $0x58] sm:$0xff]
    %v260 = vld [vmem:[#allocation2 + $0x60] sm:$0xff]
    %v261 = vld [vmem:[#allocation2 + $0x68] sm:$0xff]
    %v262 = vld [vmem:[#allocation2 + $0x70] sm:$0xff]
    %v263 = vld [vmem:[#allocation2 + $0x78] sm:$0xff]
    %v264 = vld [vmem:[%s2] sm:$0x1]
    %v266 = vperm.slane %v264, 0
    %v268 = vadd.f32 %v248, %v266
    %v269 = vadd.f32 %v249, %v266
    %v270 = vadd.f32 %v250, %v266
    %v271 = vadd.f32 %v251, %v266
    %v272 = vadd.f32 %v252, %v266
    %v273 = vadd.f32 %v253, %v266
    %v274 = vadd.f32 %v254, %v266
    %v275 = vadd.f32 %v255, %v266
    %v276 = vadd.f32 %v256, %v266
    %v277 = vadd.f32 %v257, %v266
    %v278 = vadd.f32 %v258, %v266
    %v279 = vadd.f32 %v259, %v266
    %v280 = vadd.f32 %v260, %v266
    %v281 = vadd.f32 %v261, %v266
    %v282 = vadd.f32 %v262, %v266
    %v283 = vadd.f32 %v263, %v266
    %v284 = vmax.f32 %v268, 0.0
    %v285 = vmax.f32 %v269, 0.0
    %v286 = vmax.f32 %v270, 0.0
    %v287 = vmax.f32 %v271, 0.0
    %v288 = vmax.f32 %v272, 0.0
    %v289 = vmax.f32 %v273, 0.0
    %v290 = vmax.f32 %v274, 0.0
    %v291 = vmax.f32 %v275, 0.0
    %v292 = vmax.f32 %v276, 0.0
    %v293 = vmax.f32 %v277, 0.0
    %v294 = vmax.f32 %v278, 0.0
    %v295 = vmax.f32 %v279, 0.0
    %v296 = vmax.f32 %v280, 0.0
    %v297 = vmax.f32 %v281, 0.0
    %v298 = vmax.f32 %v282, 0.0
    %v299 = vmax.f32 %v283, 0.0
    %v300 = vpack.c.bf16 %v284, %v284
    %v301 = vpack.c.bf16 %v285, %v285
    %v302 = vpack.c.bf16 %v286, %v286
    %v303 = vpack.c.bf16 %v287, %v287
    %v304 = vpack.c.bf16 %v288, %v288
    %v305 = vpack.c.bf16 %v289, %v289
    %v306 = vpack.c.bf16 %v290, %v290
    %v307 = vpack.c.bf16 %v291, %v291
    %v308 = vpack.c.bf16 %v292, %v292
    %v309 = vpack.c.bf16 %v293, %v293
    %v310 = vpack.c.bf16 %v294, %v294
    %v311 = vpack.c.bf16 %v295, %v295
    %v312 = vpack.c.bf16 %v296, %v296
    %v313 = vpack.c.bf16 %v297, %v297
    %v314 = vpack.c.bf16 %v298, %v298
    %v315 = vpack.c.bf16 %v299, %v299
    %316 = vst [vmem:[%s3] sm:$0xf] %v300
    %317 = vst [vmem:[%s3 + $0x4] sm:$0xf] %v301
    %318 = vst [vmem:[%s3 + $0x8] sm:$0xf] %v302
    %319 = vst [vmem:[%s3 + $0xc] sm:$0xf] %v303
    %320 = vst [vmem:[%s3 + $0x10] sm:$0xf] %v304
    %321 = vst [vmem:[%s3 + $0x14] sm:$0xf] %v305
    %322 = vst [vmem:[%s3 + $0x18] sm:$0xf] %v306
    %323 = vst [vmem:[%s3 + $0x1c] sm:$0xf] %v307
    %324 = vst [vmem:[%s3 + $0x20] sm:$0xf] %v308
    %325 = vst [vmem:[%s3 + $0x24] sm:$0xf] %v309
    %326 = vst [vmem:[%s3 + $0x28] sm:$0xf] %v310
    %327 = vst [vmem:[%s3 + $0x2c] sm:$0xf] %v311
    %328 = vst [vmem:[%s3 + $0x30] sm:$0xf] %v312
    %329 = vst [vmem:[%s3 + $0x34] sm:$0xf] %v313
    %330 = vst [vmem:[%s3 + $0x38] sm:$0xf] %v314
    %331 = vst [vmem:[%s3 + $0x3c] sm:$0xf] %v315
  $region21: #{bottleneck_forward.3} parent=0 // pred_fallthru
    _
  // Predicated region
  $region22: #{bottleneck_forward.3} parent=0 // pred_check
    _
  $region23: #{bottleneck_forward.3} parent=0 // pred_check_branch
    %333 = sbr.rel (0) target = $region25
  $region24: #{bottleneck_forward.3} parent=0 // pred_region
    _
  $region25: #{bottleneck_forward.3} parent=0 // pred_fallthru
    _
  // Predicated region
  $region26: #{bottleneck_forward.3} parent=0 // pred_check
    _
  $region27: #{bottleneck_forward.3} parent=0 // pred_check_branch
    %335 = sbr.rel (0) target = $region29
  $region28: #{bottleneck_forward.3} parent=0 // pred_region
    _
  $region29: #{bottleneck_forward.3} parent=0 // pred_fallthru
    _

// kernel: bottleneck_forward.4
$region0: #{bottleneck_forward.4}
  #allocation0 [shape = 'u32[]', space=smem, size = 0x4, offset = 0x4, fixed_abs, tag = 'smem constant byte address 0x4 - core index']
  #allocation1 [shape = 'u32[72,128]{1,0:T(1,128)}', space=vmem, size = 0x9000, scoped, tag = 'internal scratch']
  #allocation2 [shape = 'f32[32,128]{1,0:T(8,128)}', space=vmem, size = 0x4000, scoped, tag = 'scratch operand']
  %s0 = inlined_call_operand.vmem [shape: bf16[32,144], index: 0, kind: input, shape index: {}]
  %s1 = inlined_call_operand.vmem [shape: bf16[144,128], index: 1, kind: input, shape index: {}]
  %s2 = inlined_call_operand.vmem [shape: f32[1,128], index: 2, kind: input, shape index: {}]
  %s3 = inlined_call_operand.vmem [shape: bf16[32,128], index: 3, kind: output, shape index: {}]
  %s4 = sld [smem:[#allocation0]]
  $region30: #{bottleneck_forward.4} parent=0
    _
  %s6 = ssub.s32 1, %s4
  %s7 = scalar_select 0, %s6, %s4
  // Predicated region
  $region2: #{bottleneck_forward.4} parent=0 // pred_check
    _
  $region3: #{bottleneck_forward.4} parent=0 // pred_check_branch
    %9 = sbr.rel (0) target = $region5
  $region4: #{bottleneck_forward.4} parent=0 // pred_region
    _
  $region5: #{bottleneck_forward.4} parent=0 // pred_fallthru
    _
  // Predicated region
  $region6: #{bottleneck_forward.4} parent=0 // pred_check
    _
  $region7: #{bottleneck_forward.4} parent=0 // pred_check_branch
    %11 = sbr.rel (0) target = $region9
  $region8: #{bottleneck_forward.4} parent=0 // pred_region
    _
  $region9: #{bottleneck_forward.4} parent=0 // pred_fallthru
    _
  // Predicated region
  $region10: #{bottleneck_forward.4} parent=0 // pred_check
    _
  $region11: #{bottleneck_forward.4} parent=0 // pred_check_branch
    %13 = sbr.rel (0) target = $region13
  $region12: #{bottleneck_forward.4} parent=0 // pred_region
    _
  $region13: #{bottleneck_forward.4} parent=0 // pred_fallthru
    _
  %p15 = scmp.eq.s32.totalorder 0, 0
  // Predicated region
  $region14: #{bottleneck_forward.4} parent=0 // pred_check
    %p16 = pneg %p15
  $region15: #{bottleneck_forward.4} parent=0 // pred_check_branch
    %18 = sbr.rel (%p16) target = $region17
  $region16: #{bottleneck_forward.4} parent=0 // pred_region
    %19 = vst [vmem:[#allocation2] sm:$0xff] 0.0
    %20 = vst [vmem:[#allocation2 + $0x8] sm:$0xff] 0.0
    %21 = vst [vmem:[#allocation2 + $0x10] sm:$0xff] 0.0
    %22 = vst [vmem:[#allocation2 + $0x18] sm:$0xff] 0.0
  $region17: #{bottleneck_forward.4} parent=0 // pred_fallthru
    _
  %v23 = vld [vmem:[#allocation2] sm:$0xff]
  %v24 = vld [vmem:[#allocation2 + $0x8] sm:$0xff]
  %v25 = vld [vmem:[#allocation2 + $0x10] sm:$0xff]
  %v26 = vld [vmem:[#allocation2 + $0x18] sm:$0xff]
  %v27 = vld [vmem:[%s0] sm:$0xff]
  %v28 = vld [vmem:[%s0 + $0x8] sm:$0xff]
  %v29 = vld [vmem:[%s0 + $0x10] sm:$0xff]
  %v30 = vld [vmem:[%s0 + $0x18] sm:$0xff]
  %v31 = vld [vmem:[%s1] sm:$0xf]
  %v32 = vld [vmem:[%s1 + $0x4] sm:$0xf]
  %v33 = vld [vmem:[%s1 + $0x8] sm:$0xf]
  %v34 = vld [vmem:[%s1 + $0xc] sm:$0xf]
  %v35 = vld [vmem:[%s1 + $0x10] sm:$0xf]
  %v36 = vld [vmem:[%s1 + $0x14] sm:$0xf]
  %v37 = vld [vmem:[%s1 + $0x18] sm:$0xf]
  %v38 = vld [vmem:[%s1 + $0x1c] sm:$0xf]
  %v39 = vld [vmem:[%s1 + $0x20] sm:$0xf]
  %v40 = vld [vmem:[%s1 + $0x24] sm:$0xf]
  %v41 = vld [vmem:[%s1 + $0x28] sm:$0xf]
  %v42 = vld [vmem:[%s1 + $0x2c] sm:$0xf]
  %v43 = vld [vmem:[%s1 + $0x30] sm:$0xf]
  %v44 = vld [vmem:[%s1 + $0x34] sm:$0xf]
  %v45 = vld [vmem:[%s1 + $0x38] sm:$0xf]
  %v46 = vld [vmem:[%s1 + $0x3c] sm:$0xf]
  %v47 = vld [vmem:[%s1 + $0x40] sm:$0xf]
  %v48 = vld [vmem:[%s1 + $0x44] sm:$0xf]
  %v53 = vunpack.c.l.b16 %v27
  %v54 = vunpack.c.h.b16 %v27
  %v55 = vunpack.c.l.b16 %v28
  %v56 = vunpack.c.h.b16 %v28
  %v57 = vunpack.c.l.b16 %v29
  %v58 = vunpack.c.h.b16 %v29
  %v59 = vunpack.c.l.b16 %v30
  %v60 = vunpack.c.h.b16 %v30
  %v61 = vpack.c.b16 %v55, %v53
  %v62 = vpack.c.b16 %v56, %v54
  %v63 = vpack.c.b16 %v59, %v57
  %v64 = vpack.c.b16 %v60, %v58
  %v85 = vunpack.c.l.b16 %v31
  %v86 = vunpack.c.l.b16 %v32
  %v87 = vunpack.c.l.b16 %v33
  %v88 = vunpack.c.l.b16 %v34
  %v89 = vunpack.c.l.b16 %v35
  %v90 = vunpack.c.l.b16 %v36
  %v91 = vunpack.c.l.b16 %v37
  %v92 = vunpack.c.l.b16 %v38
  %v93 = vunpack.c.l.b16 %v39
  %v94 = vunpack.c.l.b16 %v40
  %v95 = vunpack.c.l.b16 %v41
  %v96 = vunpack.c.l.b16 %v42
  %v97 = vunpack.c.l.b16 %v43
  %v98 = vunpack.c.l.b16 %v44
  %v99 = vunpack.c.l.b16 %v45
  %v100 = vunpack.c.l.b16 %v46
  %v101 = vunpack.c.l.b16 %v47
  %v102 = vunpack.c.l.b16 %v48
  %v103 = vpack.c.b16 %v86, %v85
  %v104 = vpack.c.b16 %v88, %v87
  %v105 = vpack.c.b16 %v90, %v89
  %v106 = vpack.c.b16 %v92, %v91
  %v107 = vpack.c.b16 %v94, %v93
  %v108 = vpack.c.b16 %v96, %v95
  %v109 = vpack.c.b16 %v98, %v97
  %v110 = vpack.c.b16 %v100, %v99
  %v111 = vpack.c.b16 %v102, %v101
  %vm121 = vcmask 130048
  %v123 = vsel %vm121, %v62, 0
  %v126 = vsel %vm121, %v64, 0
  %128 = vmatpush.bf16.msra.mxu0 %v110
  %129 = vmatpush.bf16.msra.mxu0 %v109
  %130 = vmatpush.bf16.msra.mxu0 %v108
  %131 = vmatpush.bf16.msra.mxu0 %v107
  %132 = vmatpush.bf16.msra.mxu0 %v106
  %133 = vmatpush.bf16.msra.mxu0 %v105
  %134 = vmatpush.bf16.msra.mxu0 %v104
  %135 = vmatpush.bf16.msra.mxu0 %v103
  %136 = vmatmul.bf16.gmra.mxu0 %v61
  %v137 = vpop.f32.mrf.mxu0
  %v138 = vadd.f32 0.0, %v137
  %v139 = vpop.f32.mrf.mxu0
  %v140 = vadd.f32 0.0, %v139
  %141 = vmatmul.bf16.gmra.mxu0 %v63
  %v142 = vpop.f32.mrf.mxu0
  %v143 = vadd.f32 0.0, %v142
  %v144 = vpop.f32.mrf.mxu0
  %v145 = vadd.f32 0.0, %v144
  %146 = vdwg.mxu0
  %147 = vmatpush.bf16.msra.mxu0 0
  %148 = vmatpush.bf16.msra.mxu0 0
  %149 = vmatpush.bf16.msra.mxu0 0
  %150 = vmatpush.bf16.msra.mxu0 0
  %151 = vmatpush.bf16.msra.mxu0 0
  %152 = vmatpush.bf16.msra.mxu0 0
  %153 = vmatpush.bf16.msra.mxu0 0
  %154 = vmatpush.bf16.msra.mxu0 %v111
  %155 = vmatmul.bf16.gmra.mxu0 %v123
  %v156 = vpop.f32.mrf.mxu0
  %v157 = vadd.f32 %v138, %v156
  %v158 = vpop.f32.mrf.mxu0
  %v159 = vadd.f32 %v140, %v158
  %160 = vmatmul.bf16.gmra.mxu0 %v126
  %v161 = vpop.f32.mrf.mxu0
  %v162 = vadd.f32 %v143, %v161
  %v163 = vpop.f32.mrf.mxu0
  %v164 = vadd.f32 %v145, %v163
  %165 = vdwg.mxu0
  %v166 = vadd.f32 %v23, %v157
  %v167 = vadd.f32 %v24, %v159
  %v168 = vadd.f32 %v25, %v162
  %v169 = vadd.f32 %v26, %v164
  %170 = vst [vmem:[#allocation2] sm:$0xff] %v166
  %171 = vst [vmem:[#allocation2 + $0x8] sm:$0xff] %v167
  %172 = vst [vmem:[#allocation2 + $0x10] sm:$0xff] %v168
  %173 = vst [vmem:[#allocation2 + $0x18] sm:$0xff] %v169
  // Predicated region
  $region18: #{bottleneck_forward.4} parent=0 // pred_check
    %p174 = pneg %p15
  $region19: #{bottleneck_forward.4} parent=0 // pred_check_branch
    %176 = sbr.rel (%p174) target = $region21
  $region20: #{bottleneck_forward.4} parent=0 // pred_region
    %v177 = vld [vmem:[#allocation2] sm:$0xff]
    %v178 = vld [vmem:[#allocation2 + $0x8] sm:$0xff]
    %v179 = vld [vmem:[#allocation2 + $0x10] sm:$0xff]
    %v180 = vld [vmem:[#allocation2 + $0x18] sm:$0xff]
    %v181 = vld [vmem:[%s2] sm:$0x1]
    %v183 = vperm.slane %v181, 0
    %v185 = vadd.f32 %v177, %v183
    %v186 = vadd.f32 %v178, %v183
    %v187 = vadd.f32 %v179, %v183
    %v188 = vadd.f32 %v180, %v183
    %v189 = vmax.f32 %v185, 0.0
    %v190 = vmax.f32 %v186, 0.0
    %v191 = vmax.f32 %v187, 0.0
    %v192 = vmax.f32 %v188, 0.0
    %v193 = vpack.c.bf16 %v189, %v189
    %v194 = vpack.c.bf16 %v190, %v190
    %v195 = vpack.c.bf16 %v191, %v191
    %v196 = vpack.c.bf16 %v192, %v192
    %197 = vst [vmem:[%s3] sm:$0xf] %v193
    %198 = vst [vmem:[%s3 + $0x4] sm:$0xf] %v194
    %199 = vst [vmem:[%s3 + $0x8] sm:$0xf] %v195
    %200 = vst [vmem:[%s3 + $0xc] sm:$0xf] %v196
  $region21: #{bottleneck_forward.4} parent=0 // pred_fallthru
    _
  // Predicated region
  $region22: #{bottleneck_forward.4} parent=0 // pred_check
    _
  $region23: #{bottleneck_forward.4} parent=0 // pred_check_branch
    %202 = sbr.rel (0) target = $region25
  $region24: #{bottleneck_forward.4} parent=0 // pred_region
    _
  $region25: #{bottleneck_forward.4} parent=0 // pred_fallthru
    _
  // Predicated region
  $region26: #{bottleneck_forward.4} parent=0 // pred_check
    _
  $region27: #{bottleneck_forward.4} parent=0 // pred_check_branch
    %204 = sbr.rel (0) target = $region29
  $region28: #{bottleneck_forward.4} parent=0 // pred_region
    _
  $region29: #{bottleneck_forward.4} parent=0 // pred_fallthru
    _

// kernel: bottleneck_forward.5
$region0: #{bottleneck_forward.5}
  #allocation0 [shape = 'u32[]', space=smem, size = 0x4, offset = 0x4, fixed_abs, tag = 'smem constant byte address 0x4 - core index']
  #allocation1 [shape = 'u32[72,128]{1,0:T(1,128)}', space=vmem, size = 0x9000, scoped, tag = 'internal scratch']
  %s0 = inlined_call_operand.vmem [shape: bf16[32,16], index: 0, kind: input, shape index: {}]
  %s1 = inlined_call_operand.vmem [shape: bf16[16,128], index: 1, kind: input, shape index: {}]
  %s2 = inlined_call_operand.vmem [shape: bf16[32,64], index: 2, kind: input, shape index: {}]
  %s3 = inlined_call_operand.vmem [shape: bf16[64,128], index: 3, kind: input, shape index: {}]
  %s4 = inlined_call_operand.vmem [shape: f32[1,128], index: 4, kind: input, shape index: {}]
  %s5 = inlined_call_operand.hbm [shape: f32[32,128], index: 5, kind: output, shape index: {}]
  %s6 = sld [smem:[#allocation0]]
  $region30: #{bottleneck_forward.5} parent=0
    _
  %s8 = ssub.s32 1, %s6
  %s9 = scalar_select 0, %s8, %s6
  $region1: #{bottleneck_forward.5} parent=0
    #allocation2 [shape = 'u8[16384]{0}', space=vmem, size = 0x4000, scoped, tag = 'output window, operand 0, single buffered']
    #allocation3 [shape = 's32[1]{0}', space=sflag, size = 0x4, scoped, tag = 'scoped memory for bottleneck_forward.5']
    %10 = vsyncpa [#allocation3], 0
    // Predicated region
    $region2: #{bottleneck_forward.5} parent=1 // pred_check
      _
    $region3: #{bottleneck_forward.5} parent=1 // pred_check_branch
      %12 = sbr.rel (0) target = $region5
    $region4: #{bottleneck_forward.5} parent=1 // pred_region
      _
    $region5: #{bottleneck_forward.5} parent=1 // pred_fallthru
      _
    // Predicated region
    $region6: #{bottleneck_forward.5} parent=1 // pred_check
      _
    $region7: #{bottleneck_forward.5} parent=1 // pred_check_branch
      %14 = sbr.rel (0) target = $region9
    $region8: #{bottleneck_forward.5} parent=1 // pred_region
      _
    $region9: #{bottleneck_forward.5} parent=1 // pred_fallthru
      _
    // Predicated region
    $region10: #{bottleneck_forward.5} parent=1 // pred_check
      _
    $region11: #{bottleneck_forward.5} parent=1 // pred_check_branch
      %16 = sbr.rel (0) target = $region13
    $region12: #{bottleneck_forward.5} parent=1 // pred_region
      _
    $region13: #{bottleneck_forward.5} parent=1 // pred_fallthru
      _
    // Predicated region
    $region14: #{bottleneck_forward.5} parent=1 // pred_check
      _
    $region15: #{bottleneck_forward.5} parent=1 // pred_check_branch
      %18 = sbr.rel (0) target = $region17
    $region16: #{bottleneck_forward.5} parent=1 // pred_region
      _
    $region17: #{bottleneck_forward.5} parent=1 // pred_fallthru
      _
    // Predicated region
    $region18: #{bottleneck_forward.5} parent=1 // pred_check
      _
    $region19: #{bottleneck_forward.5} parent=1 // pred_check_branch
      %20 = sbr.rel (0) target = $region21
    $region20: #{bottleneck_forward.5} parent=1 // pred_region
      _
    $region21: #{bottleneck_forward.5} parent=1 // pred_fallthru
      _
    %v22 = vld [vmem:[%s0] sm:$0xf]
    %v23 = vld [vmem:[%s0 + $0x4] sm:$0xf]
    %v24 = vld [vmem:[%s0 + $0x8] sm:$0xf]
    %v25 = vld [vmem:[%s0 + $0xc] sm:$0xf]
    %v26 = vld [vmem:[%s1] sm:$0xf]
    %v27 = vld [vmem:[%s1 + $0x4] sm:$0xf]
    %v28 = vld [vmem:[%s2] sm:$0xf]
    %v29 = vld [vmem:[%s2 + $0x4] sm:$0xf]
    %v30 = vld [vmem:[%s2 + $0x8] sm:$0xf]
    %v31 = vld [vmem:[%s2 + $0xc] sm:$0xf]
    %v32 = vld [vmem:[%s3] sm:$0xf]
    %v33 = vld [vmem:[%s3 + $0x4] sm:$0xf]
    %v34 = vld [vmem:[%s3 + $0x8] sm:$0xf]
    %v35 = vld [vmem:[%s3 + $0xc] sm:$0xf]
    %v36 = vld [vmem:[%s3 + $0x10] sm:$0xf]
    %v37 = vld [vmem:[%s3 + $0x14] sm:$0xf]
    %v38 = vld [vmem:[%s3 + $0x18] sm:$0xf]
    %v39 = vld [vmem:[%s3 + $0x1c] sm:$0xf]
    %v44 = vunpack.c.l.b16 %v28
    %v45 = vunpack.c.l.b16 %v29
    %v46 = vunpack.c.l.b16 %v30
    %v47 = vunpack.c.l.b16 %v31
    %v48 = vpack.c.b16 %v45, %v44
    %v49 = vpack.c.b16 %v47, %v46
    %v58 = vunpack.c.l.b16 %v32
    %v59 = vunpack.c.l.b16 %v33
    %v60 = vunpack.c.l.b16 %v34
    %v61 = vunpack.c.l.b16 %v35
    %v62 = vunpack.c.l.b16 %v36
    %v63 = vunpack.c.l.b16 %v37
    %v64 = vunpack.c.l.b16 %v38
    %v65 = vunpack.c.l.b16 %v39
    %v66 = vpack.c.b16 %v59, %v58
    %v67 = vpack.c.b16 %v61, %v60
    %v68 = vpack.c.b16 %v63, %v62
    %v69 = vpack.c.b16 %v65, %v64
    %vm74 = vcmask 523264
    %v76 = vsel %vm74, %v48, 0
    %v79 = vsel %vm74, %v49, 0
    %81 = vmatpush.bf16.msra.mxu0 0
    %82 = vmatpush.bf16.msra.mxu0 0
    %83 = vmatpush.bf16.msra.mxu0 0
    %84 = vmatpush.bf16.msra.mxu0 0
    %85 = vmatpush.bf16.msra.mxu0 %v69
    %86 = vmatpush.bf16.msra.mxu0 %v68
    %87 = vmatpush.bf16.msra.mxu0 %v67
    %88 = vmatpush.bf16.msra.mxu0 %v66
    %89 = vmatmul.bf16.gmra.mxu0 %v76
    %v90 = vpop.f32.mrf.mxu0
    %v91 = vadd.f32 0.0, %v90
    %v92 = vpop.f32.mrf.mxu0
    %v93 = vadd.f32 0.0, %v92
    %94 = vmatmul.bf16.gmra.mxu0 %v79
    %v95 = vpop.f32.mrf.mxu0
    %v96 = vadd.f32 0.0, %v95
    %v97 = vpop.f32.mrf.mxu0
    %v98 = vadd.f32 0.0, %v97
    %99 = vdwg.mxu0
    %v104 = vunpack.c.l.b16 %v22
    %v105 = vunpack.c.l.b16 %v23
    %v106 = vunpack.c.l.b16 %v24
    %v107 = vunpack.c.l.b16 %v25
    %v108 = vpack.c.b16 %v105, %v104
    %v109 = vpack.c.b16 %v107, %v106
    %v112 = vunpack.c.l.b16 %v26
    %v113 = vunpack.c.l.b16 %v27
    %v114 = vpack.c.b16 %v113, %v112
    %vm116 = vcmask 130048
    %v118 = vsel %vm116, %v108, 0
    %v121 = vsel %vm116, %v109, 0
    %123 = vmatpush.bf16.msra.mxu0 0
    %124 = vmatpush.bf16.msra.mxu0 0
    %125 = vmatpush.bf16.msra.mxu0 0
    %126 = vmatpush.bf16.msra.mxu0 0
    %127 = vmatpush.bf16.msra.mxu0 0
    %128 = vmatpush.bf16.msra.mxu0 0
    %129 = vmatpush.bf16.msra.mxu0 0
    %130 = vmatpush.bf16.msra.mxu0 %v114
    %131 = vmatmul.bf16.gmra.mxu0 %v118
    %v132 = vpop.f32.mrf.mxu0
    %v133 = vadd.f32 %v91, %v132
    %v134 = vpop.f32.mrf.mxu0
    %v135 = vadd.f32 %v93, %v134
    %136 = vmatmul.bf16.gmra.mxu0 %v121
    %v137 = vpop.f32.mrf.mxu0
    %v138 = vadd.f32 %v96, %v137
    %v139 = vpop.f32.mrf.mxu0
    %v140 = vadd.f32 %v98, %v139
    %141 = vdwg.mxu0
    %v142 = vld [vmem:[%s4] sm:$0x1]
    %v144 = vperm.slane %v142, 0
    %v146 = vadd.f32 %v133, %v144
    %v147 = vadd.f32 %v135, %v144
    %v148 = vadd.f32 %v138, %v144
    %v149 = vadd.f32 %v140, %v144
    %v150 = vmax.f32 %v146, 0.0
    %v151 = vmax.f32 %v147, 0.0
    %v152 = vmax.f32 %v148, 0.0
    %v153 = vmax.f32 %v149, 0.0
    %154 = vst [vmem:[#allocation2] sm:$0xff] %v150
    %155 = vst [vmem:[#allocation2 + $0x8] sm:$0xff] %v151
    %156 = vst [vmem:[#allocation2 + $0x10] sm:$0xff] %v152
    %157 = vst [vmem:[#allocation2 + $0x18] sm:$0xff] %v153
    // Predicated region
    $region22: #{bottleneck_forward.5} parent=1 // pred_check
      _
    $region23: #{bottleneck_forward.5} parent=1 // pred_check_branch
      %159 = sbr.rel (0) target = $region25
    $region24: #{bottleneck_forward.5} parent=1 // pred_region
      %161 = vsyncadd [#allocation3], 0
      %s162 = sshll.u32 [#allocation2], 4
      %s163 = int_to_ptr.vmem [resolvable:$true] %s162
      %s164 = sshll.u32 %s5, 4
      %s165 = int_to_ptr.hbm [resolvable:$true] %s164
      %170 = dma.vmem_to_hbm [thread:$0]  %s163, 512, %s165, [#allocation3], 128, 128, 8
    $region25: #{bottleneck_forward.5} parent=1 // pred_fallthru
      _
    // Predicated region
    $region26: #{bottleneck_forward.5} parent=1 // pred_check
      _
    $region27: #{bottleneck_forward.5} parent=1 // pred_check_branch
      %172 = sbr.rel (0) target = $region29
    $region28: #{bottleneck_forward.5} parent=1 // pred_region
      %174 = dma.done [#allocation3], 512
    $region29: #{bottleneck_forward.5} parent=1 // pred_fallthru
      _
    %175 = vsyncpa [#allocation3], 1

</llo_original>
